<compile_context>
chip_gen: v7x
topology: tpu7x:2x2x1
jax: 0.10.0
libtpu: 0.0.40
codegen_flags: <defaults>
</compile_context>

<pallas_src>
import jax
import jax.numpy as jnp
from jax.experimental import pallas as pl
from jax.experimental.pallas import tpu as pltpu

IN_FEATURES = 512
NUM_CLASSES = 2


def _round_up(n: int, m: int) -> int:
    return ((n + m - 1) // m) * m


def gender_classifier_kernel(x_ref, wd_ref, bd_ref, o_ref):
    # x_ref: (TB, 512), wd_ref: (512, 2) pre-differenced, bd_ref: (1, 2), o_ref: (TB, 2)
    # t[:, i] = logit_{1-i} - logit_i ;  softmax_i = 1 / (1 + exp(t_i))
    t = jnp.dot(x_ref[...], wd_ref[...],
                preferred_element_type=jnp.float32) + bd_ref[...]
    o_ref[...] = (1.0 / (1.0 + jnp.exp(t))).astype(o_ref.dtype)


def prepare_params(weight, bias):
    """One-time conversion from PyTorch layout to kernel layout (do this outside
    the hot path).

    weight: (2, 512) float — torch nn.Linear weight
    bias:   (2,)     float — torch nn.Linear bias
    Returns (w_d (512, 2), b_d (1, 2)) with column i = param_{1-i} - param_i.
    """
    w_d = jnp.stack([weight[1] - weight[0], weight[0] - weight[1]], axis=1)
    b_d = jnp.stack([bias[1] - bias[0], bias[0] - bias[1]]).reshape(1, NUM_CLASSES)
    return w_d.astype(jnp.float32), b_d.astype(jnp.float32)


def gender_classifier(x, w_d, b_d, *, batch_tile=1024, vmem_limit_bytes=None):
    """x: (B, 512) f32 or bf16; (w_d, b_d) from prepare_params()."""
    B, F = x.shape
    assert F == IN_FEATURES
    assert w_d.shape == (IN_FEATURES, NUM_CLASSES)
    assert b_d.shape == (1, NUM_CLASSES)

    # Batch tile: multiple of 8 (f32 sublane), never larger than needed.
    tb = max(8, min(_round_up(batch_tile, 8), _round_up(B, 8)))
    grid = (pl.cdiv(B, tb),)

    # Match the matmul operand dtype to x (no-op for f32; enables bf16 streaming).
    w_d = w_d.astype(x.dtype)

    if vmem_limit_bytes is None:
        # Double-buffered x + out tiles, resident params, plus headroom.
        est = (2 * (tb * IN_FEATURES * x.dtype.itemsize + tb * NUM_CLASSES * 4)
               + 2 * (IN_FEATURES * NUM_CLASSES * w_d.dtype.itemsize + NUM_CLASSES * 4)
               + (4 << 20))
        vmem_limit_bytes = max(est, 16 << 20)

    return pl.pallas_call(
        gender_classifier_kernel,
        out_shape=jax.ShapeDtypeStruct((B, NUM_CLASSES), jnp.float32),
        grid_spec=pltpu.PrefetchScalarGridSpec(
            num_scalar_prefetch=0,
            grid=grid,
            in_specs=[
                pl.BlockSpec((tb, IN_FEATURES), lambda i: (i, 0)),
                pl.BlockSpec((IN_FEATURES, NUM_CLASSES), lambda i: (0, 0)),  # resident
                pl.BlockSpec((1, NUM_CLASSES), lambda i: (0, 0)),            # resident
            ],
            out_specs=pl.BlockSpec((tb, NUM_CLASSES), lambda i: (i, 0)),
        ),
        compiler_params=pltpu.CompilerParams(
            dimension_semantics=("parallel",),
            vmem_limit_bytes=vmem_limit_bytes,
        ),
    )(x, w_d, b_d)


if __name__ == "__main__":
    key = jax.random.PRNGKey(0)
    k_x, k_w, k_b = jax.random.split(key, 3)

    B = 64
    x = jax.random.normal(k_x, (B, IN_FEATURES), dtype=jnp.float32)

    # Deterministic params (mimics nn.Linear uniform(-1/sqrt(512), 1/sqrt(512)))
    bound = 1.0 / (IN_FEATURES ** 0.5)
    weight = jax.random.uniform(
        k_w, (NUM_CLASSES, IN_FEATURES), minval=-bound, maxval=bound, dtype=jnp.float32
    )
    bias = jax.random.uniform(
        k_b, (NUM_CLASSES,), minval=-bound, maxval=bound, dtype=jnp.float32
    )

    # One-time parameter prep (outside the hot path).
    w_d, b_d = prepare_params(weight, bias)

    # Small batch tile here so the test exercises a multi-step, pipelined grid.
    out = gender_classifier(x, w_d, b_d, batch_tile=16)
    out = jax.block_until_ready(out)

    # Reference check (plain JAX, matches torch.softmax(fc(x), dim=1))
    logits_ref = x @ weight.T + bias
    probs_ref = jax.nn.softmax(logits_ref, axis=1)
    assert out.shape == (B, NUM_CLASSES)
    assert jnp.allclose(out, probs_ref, atol=1e-5, rtol=1e-5)
    assert jnp.allclose(jnp.sum(out, axis=1), 1.0, atol=1e-5)

    print("KERNEL_OK")
</pallas_src>

<mosaic_0001>
module attributes {stable_mosaic.version = 11 : i64} {
  func.func @gender_classifier_kernel(%arg0: i32, %arg1: memref<16x512xf32, #tpu.memory_space<vmem>>, %arg2: memref<512x2xf32, #tpu.memory_space<vmem>>, %arg3: memref<1x2xf32, #tpu.memory_space<vmem>>, %arg4: memref<16x2xf32, #tpu.memory_space<vmem>>) attributes {dimension_semantics = [#tpu.dimension_semantics<parallel>], iteration_bounds = array<i64: 4>, scalar_prefetch = 0 : i64, scratch_operands = 0 : i64, tpu.core_type = #tpu.core_type<tc>, window_params = [{transform_indices = @transform_0, window_bounds = array<i64: 16, 512>}, {pipeline_mode = #tpu.pipeline_mode<synchronous>, transform_indices = @transform_1, window_bounds = array<i64: 512, 2>}, {pipeline_mode = #tpu.pipeline_mode<synchronous>, transform_indices = @transform_2, window_bounds = array<i64: 1, 2>}, {transform_indices = @transform_3, window_bounds = array<i64: 16, 2>}]} {
    %c0 = arith.constant 0 : index
    %c0_0 = arith.constant 0 : index
    %0 = vector.load %arg1[%c0, %c0_0] : memref<16x512xf32, #tpu.memory_space<vmem>>, vector<16x512xf32>
    %c0_1 = arith.constant 0 : index
    %c0_2 = arith.constant 0 : index
    %1 = vector.load %arg2[%c0_1, %c0_2] : memref<512x2xf32, #tpu.memory_space<vmem>>, vector<512x2xf32>
    %cst = arith.constant dense<0.000000e+00> : vector<16x2xf32>
    %2 = tpu.matmul %0, %1, %cst {dimension_numbers = #tpu.dot_dimension_numbers<[1], [0], [0], [1], [0, 0, 1, 1], [], []>} : vector<16x512xf32>, vector<512x2xf32>, vector<16x2xf32> -> vector<16x2xf32>
    %c0_3 = arith.constant 0 : index
    %c0_4 = arith.constant 0 : index
    %3 = vector.load %arg3[%c0_3, %c0_4] : memref<1x2xf32, #tpu.memory_space<vmem>>, vector<1x2xf32>
    %4 = vector.broadcast %3 : vector<1x2xf32> to vector<16x2xf32>
    %5 = arith.addf %2, %4 : vector<16x2xf32>
    %6 = math.exp %5 : vector<16x2xf32>
    %cst_5 = arith.constant 1.000000e+00 : f32
    %7 = vector.broadcast %cst_5 : f32 to vector<16x2xf32>
    %8 = arith.addf %7, %6 : vector<16x2xf32>
    %cst_6 = arith.constant 1.000000e+00 : f32
    %9 = vector.broadcast %cst_6 : f32 to vector<16x2xf32>
    %10 = arith.divf %9, %8 : vector<16x2xf32>
    %c0_7 = arith.constant 0 : index
    %c0_8 = arith.constant 0 : index
    %11 = vector.load %arg4[%c0_7, %c0_8] : memref<16x2xf32, #tpu.memory_space<vmem>>, vector<16x2xf32>
    tpu.vector_store %arg4[%c0_7, %c0_8], %10 {strides = array<i32>} : memref<16x2xf32, #tpu.memory_space<vmem>>, vector<16x2xf32>,
    return
  }
  func.func @transform_0(%arg0: i32) -> (i32, i32) {
    %c0_i32 = arith.constant 0 : i32
    %c0_i32_0 = arith.constant 0 : i32
    return %arg0, %c0_i32 : i32, i32
  }
  func.func @transform_1(%arg0: i32) -> (i32, i32) {
    %c0_i32 = arith.constant 0 : i32
    %c0_i32_0 = arith.constant 0 : i32
    %c0_i32_1 = arith.constant 0 : i32
    return %c0_i32, %c0_i32_0 : i32, i32
  }
  func.func @transform_2(%arg0: i32) -> (i32, i32) {
    %c0_i32 = arith.constant 0 : i32
    %c0_i32_0 = arith.constant 0 : i32
    %c0_i32_1 = arith.constant 0 : i32
    return %c0_i32, %c0_i32_0 : i32, i32
  }
  func.func @transform_3(%arg0: i32) -> (i32, i32) {
    %c0_i32 = arith.constant 0 : i32
    %c0_i32_0 = arith.constant 0 : i32
    return %arg0, %c0_i32 : i32, i32
  }
}

</mosaic_0001>

<llo_original>
// kernel: tpu_custom_call.1
$region0: #{tpu_custom_call.1}
  #allocation0 [shape = 'u32[]', space=smem, size = 0x4, offset = 0x4, fixed_abs, tag = 'smem constant byte address 0x4 - core index']
  #allocation1 [shape = 'u32[144,128]{1,0:T(1,128)}', space=vmem, size = 0x12000, scoped, tag = 'internal scratch']
  %s0 = inlined_call_operand.vmem [shape: f32[64,512], index: 0, kind: input, shape index: {}]
  %s1 = inlined_call_operand.vmem [shape: f32[512,2], index: 1, kind: input, shape index: {}]
  %s2 = inlined_call_operand.vmem [shape: f32[1,2], index: 2, kind: input, shape index: {}]
  %s3 = inlined_call_operand.vmem [shape: f32[64,2], index: 3, kind: output, shape index: {}]
  %s4 = sld [smem:[#allocation0]]
  $region45: #{tpu_custom_call.1} parent=0
    _
  %s6 = ssub.s32 1, %s4
  %s7 = scalar_select 0, %s6, %s4
  loop: start=0, step=1, limit=6
  $region2: #{tpu_custom_call.1} parent=0 // loop_pre_header
    _
  $region3: #{tpu_custom_call.1} parent=0 // loop_header
    %s9 = sphi 0, %s13
    %p10 = scmp.ge.s32.totalorder %s9, 6
    %s19 = sphi 0, %s21
    %s22 = sphi 0, %s19
    %s23 = sphi 0, %s22
    %s39 = sphi 0, %s23
    %s43 = sphi 0, %s43
    %s45 = sphi 0, %s43
    %s46 = sphi 0, %s45
    %s60 = sphi 0, %s46
    %s64 = sphi 0, %s64
    %s66 = sphi 0, %s64
    %s67 = sphi 0, %s66
    %s81 = sphi 0, %s67
    %s87 = sphi 0, %s89
    %s90 = sphi 0, %s87
    %s91 = sphi 0, %s90
    %s107 = sphi 0, %s91
  $region4: #{tpu_custom_call.1} parent=0 // loop_header_branch
    %12 = sbr.rel (%p10) target = $region8
  $region5: #{tpu_custom_call.1} parent=0 // loop_body
    %s14 = ssub.s32 %s9, 1
    %s15 = ssub.s32 %s9, 2
    %s16 = sadd.s32 %s9, 1
    %s17 = ssub.s32 %s9, %s16
    %p18 = scmp.eq.s32.totalorder %s17, 0
    %s20 = sadd.s32 %s19, 1
    %s21 = scalar_select %p18, %s19, %s20
    %p24 = pneg %p18
    %p25 = scmp.eq.s32.totalorder %s9, 3
    %p26 = por %p24, %p25
    %p27 = scmp.ne.s32.totalorder %s19, %s22
    %p28 = scmp.eq.s32.totalorder %s9, 0
    %p29 = por %p27, %p28
    %p30 = scmp.ne.s32.totalorder %s19, %s22
    %p31 = scmp.eq.s32.totalorder %s14, 3
    %p32 = por %p30, %p31
    %p33 = scmp.ne.s32.totalorder %s22, %s23
    %p34 = scmp.eq.s32.totalorder %s14, 0
    %p35 = por %p33, %p34
    %p36 = scmp.ne.s32.totalorder %s22, %s23
    %p37 = scmp.eq.s32.totalorder %s15, 3
    %p38 = por %p36, %p37
    %p40 = scmp.ne.s32.totalorder %s23, %s39
    %p41 = scmp.eq.s32.totalorder %s15, 0
    %p42 = por %p40, %p41
    %s44 = sadd.s32 %s43, 1
    %p47 = scmp.eq.s32.totalorder %s9, 3
    %p48 = scmp.ne.s32.totalorder %s43, %s45
    %p49 = scmp.eq.s32.totalorder %s9, 0
    %p50 = por %p48, %p49
    %p51 = scmp.ne.s32.totalorder %s43, %s45
    %p52 = scmp.eq.s32.totalorder %s14, 3
    %p53 = por %p51, %p52
    %p54 = scmp.ne.s32.totalorder %s45, %s46
    %p55 = scmp.eq.s32.totalorder %s14, 0
    %p56 = por %p54, %p55
    %p57 = scmp.ne.s32.totalorder %s45, %s46
    %p58 = scmp.eq.s32.totalorder %s15, 3
    %p59 = por %p57, %p58
    %p61 = scmp.ne.s32.totalorder %s46, %s60
    %p62 = scmp.eq.s32.totalorder %s15, 0
    %p63 = por %p61, %p62
    %s65 = sadd.s32 %s64, 1
    %p68 = scmp.eq.s32.totalorder %s9, 3
    %p69 = scmp.ne.s32.totalorder %s64, %s66
    %p70 = scmp.eq.s32.totalorder %s9, 0
    %p71 = por %p69, %p70
    %p72 = scmp.ne.s32.totalorder %s64, %s66
    %p73 = scmp.eq.s32.totalorder %s14, 3
    %p74 = por %p72, %p73
    %p75 = scmp.ne.s32.totalorder %s66, %s67
    %p76 = scmp.eq.s32.totalorder %s14, 0
    %p77 = por %p75, %p76
    %p78 = scmp.ne.s32.totalorder %s66, %s67
    %p79 = scmp.eq.s32.totalorder %s15, 3
    %p80 = por %p78, %p79
    %p82 = scmp.ne.s32.totalorder %s67, %s81
    %p83 = scmp.eq.s32.totalorder %s15, 0
    %p84 = por %p82, %p83
    %s85 = ssub.s32 %s9, %s16
    %p86 = scmp.eq.s32.totalorder %s85, 0
    %s88 = sadd.s32 %s87, 1
    %s89 = scalar_select %p86, %s87, %s88
    %p92 = pneg %p86
    %p93 = scmp.eq.s32.totalorder %s9, 3
    %p94 = por %p92, %p93
    %p95 = scmp.ne.s32.totalorder %s87, %s90
    %p96 = scmp.eq.s32.totalorder %s9, 0
    %p97 = por %p95, %p96
    %p98 = scmp.ne.s32.totalorder %s87, %s90
    %p99 = scmp.eq.s32.totalorder %s14, 3
    %p100 = por %p98, %p99
    %p101 = scmp.ne.s32.totalorder %s90, %s91
    %p102 = scmp.eq.s32.totalorder %s14, 0
    %p103 = por %p101, %p102
    %p104 = scmp.ne.s32.totalorder %s90, %s91
    %p105 = scmp.eq.s32.totalorder %s15, 3
    %p106 = por %p104, %p105
    %p108 = scmp.ne.s32.totalorder %s91, %s107
    %p109 = scmp.eq.s32.totalorder %s15, 0
    %p110 = por %p108, %p109
    %p111 = scmp.le.s32.totalorder 1, %s9
    %p112 = scmp.lt.s32.totalorder %s9, 5
    %p113 = pnand %p111, %p112
    %p114 = pneg %p113
    // Predicated region
    $region9: #{tpu_custom_call.1} parent=5 // pred_check
      _
    $region10: #{tpu_custom_call.1} parent=5 // pred_check_branch
      %116 = sbr.rel (%p113) target = $region12
    $region11: #{tpu_custom_call.1} parent=5 // pred_region
      %s117 = ssub.s32 %s9, 1
      // Predicated region
      $region13: #{tpu_custom_call.1} parent=11 // pred_check
        %p118 = pneg %p56
      $region14: #{tpu_custom_call.1} parent=11 // pred_check_branch
        %120 = sbr.rel (%p118) target = $region16
      $region15: #{tpu_custom_call.1} parent=11 // pred_region
        _
      $region16: #{tpu_custom_call.1} parent=11 // pred_fallthru
        _
      // Predicated region
      $region17: #{tpu_custom_call.1} parent=11 // pred_check
        %p121 = pneg %p77
      $region18: #{tpu_custom_call.1} parent=11 // pred_check_branch
        %123 = sbr.rel (%p121) target = $region20
      $region19: #{tpu_custom_call.1} parent=11 // pred_region
        _
      $region20: #{tpu_custom_call.1} parent=11 // pred_fallthru
        _
    $region12: #{tpu_custom_call.1} parent=5 // pred_fallthru
      _
    %p124 = scmp.lt.s32.totalorder %s9, 4
    // Predicated region
    $region21: #{tpu_custom_call.1} parent=5 // pred_check
      %p125 = pneg %p124
    $region22: #{tpu_custom_call.1} parent=5 // pred_check_branch
      %127 = sbr.rel (%p125) target = $region24
    $region23: #{tpu_custom_call.1} parent=5 // pred_region
      // Predicated region
      $region25: #{tpu_custom_call.1} parent=23 // pred_check
        %p128 = pneg %p29
      $region26: #{tpu_custom_call.1} parent=23 // pred_check_branch
        %130 = sbr.rel (%p128) target = $region28
      $region27: #{tpu_custom_call.1} parent=23 // pred_region
        %s131 = smul.u32 2, %s9
        %p132 = scmp.lt.s32.totalorder %s131, 7
        %s133 = scalar_select %p132, %s131, 7
        %s134 = smul.addr %s133, 4
        %s135 = smul.addr %s134, 8
        %s136 = scalar_lea.vmem %s0, %s135
        %s137 = smul.u32 2, %s9
      $region28: #{tpu_custom_call.1} parent=23 // pred_fallthru
        _
    $region24: #{tpu_custom_call.1} parent=5 // pred_fallthru
      _
    %p138 = scmp.le.s32.totalorder 1, %s9
    %p139 = scmp.lt.s32.totalorder %s9, 5
    %p140 = pnand %p138, %p139
    %p141 = pneg %p140
    // Predicated region
    $region29: #{tpu_custom_call.1} parent=5 // pred_check
      _
    $region30: #{tpu_custom_call.1} parent=5 // pred_check_branch
      %143 = sbr.rel (%p140) target = $region32
    $region31: #{tpu_custom_call.1} parent=5 // pred_region
      %s144 = ssub.s32 %s9, 1
      %s145 = smul.u32 2, %s14
      %p146 = scmp.lt.s32.totalorder %s145, 7
      %s147 = scalar_select %p146, %s145, 7
      %s148 = smul.addr %s147, 4
      %s149 = smul.addr %s148, 8
      %s150 = scalar_lea.vmem %s0, %s149
      %p151 = pneg %p35
      %p152 = pneg %p32
      %p153 = pneg %p56
      %p154 = pneg %p53
      %p155 = pneg %p77
      %p156 = pneg %p74
      %p157 = pneg %p103
      %p158 = pneg %p100
      %s159 = smul.u32 2, %s14
      %p160 = scmp.lt.s32.totalorder %s159, 7
      %s161 = scalar_select %p160, %s159, 7
      %s162 = smul.addr %s161, 8
      %s163 = scalar_lea.vmem %s3, %s162
      %s164 = smul.u32 2, %s14
      %p165 = scmp.lt.s32.totalorder %s164, 7
      %s166 = scalar_select %p165, %s164, 7
      %s167 = smul.addr %s166, 4
      %s168 = smul.addr %s167, 8
      %s169 = scalar_lea.vmem %s0, %s168
      %s170 = smul.u32 2, %s14
      %s171 = smul.u32 2, %s14
      %p172 = scmp.lt.s32.totalorder %s171, 7
      %s173 = scalar_select %p172, %s171, 7
      %s174 = smul.addr %s173, 8
      %s175 = scalar_lea.vmem %s3, %s174
      %s176 = smul.u32 2, %s14
      %v177 = vld [vmem:[%s169] sm:$0xff]
      %v178 = vld [vmem:[%s169 + $0x8] sm:$0xff]
      %v179 = vld [vmem:[%s169 + $0x10] sm:$0xff]
      %v180 = vld [vmem:[%s169 + $0x18] sm:$0xff]
      %v181 = vld [vmem:[%s169 + $0x20] sm:$0xff]
      %v182 = vld [vmem:[%s169 + $0x28] sm:$0xff]
      %v183 = vld [vmem:[%s169 + $0x30] sm:$0xff]
      %v184 = vld [vmem:[%s169 + $0x38] sm:$0xff]
      %v185 = vld [vmem:[%s1] sm:$0xff]
      %v186 = vld [vmem:[%s1 + $0x8] sm:$0xff]
      %v187 = vld [vmem:[%s1 + $0x10] sm:$0xff]
      %v188 = vld [vmem:[%s1 + $0x18] sm:$0xff]
      %v189 = vld [vmem:[%s1 + $0x20] sm:$0xff]
      %v190 = vld [vmem:[%s1 + $0x28] sm:$0xff]
      %v191 = vld [vmem:[%s1 + $0x30] sm:$0xff]
      %v192 = vld [vmem:[%s1 + $0x38] sm:$0xff]
      %v193 = vld [vmem:[%s1 + $0x40] sm:$0xff]
      %v194 = vld [vmem:[%s1 + $0x48] sm:$0xff]
      %v195 = vld [vmem:[%s1 + $0x50] sm:$0xff]
      %v196 = vld [vmem:[%s1 + $0x58] sm:$0xff]
      %v197 = vld [vmem:[%s1 + $0x60] sm:$0xff]
      %v198 = vld [vmem:[%s1 + $0x68] sm:$0xff]
      %v199 = vld [vmem:[%s1 + $0x70] sm:$0xff]
      %v200 = vld [vmem:[%s1 + $0x78] sm:$0xff]
      %v201 = vld [vmem:[%s1 + $0x80] sm:$0xff]
      %v202 = vld [vmem:[%s1 + $0x88] sm:$0xff]
      %v203 = vld [vmem:[%s1 + $0x90] sm:$0xff]
      %v204 = vld [vmem:[%s1 + $0x98] sm:$0xff]
      %v205 = vld [vmem:[%s1 + $0xa0] sm:$0xff]
      %v206 = vld [vmem:[%s1 + $0xa8] sm:$0xff]
      %v207 = vld [vmem:[%s1 + $0xb0] sm:$0xff]
      %v208 = vld [vmem:[%s1 + $0xb8] sm:$0xff]
      %v209 = vld [vmem:[%s1 + $0xc0] sm:$0xff]
      %v210 = vld [vmem:[%s1 + $0xc8] sm:$0xff]
      %v211 = vld [vmem:[%s1 + $0xd0] sm:$0xff]
      %v212 = vld [vmem:[%s1 + $0xd8] sm:$0xff]
      %v213 = vld [vmem:[%s1 + $0xe0] sm:$0xff]
      %v214 = vld [vmem:[%s1 + $0xe8] sm:$0xff]
      %v215 = vld [vmem:[%s1 + $0xf0] sm:$0xff]
      %v216 = vld [vmem:[%s1 + $0xf8] sm:$0xff]
      %v217 = vld [vmem:[%s1 + $0x100] sm:$0xff]
      %v218 = vld [vmem:[%s1 + $0x108] sm:$0xff]
      %v219 = vld [vmem:[%s1 + $0x110] sm:$0xff]
      %v220 = vld [vmem:[%s1 + $0x118] sm:$0xff]
      %v221 = vld [vmem:[%s1 + $0x120] sm:$0xff]
      %v222 = vld [vmem:[%s1 + $0x128] sm:$0xff]
      %v223 = vld [vmem:[%s1 + $0x130] sm:$0xff]
      %v224 = vld [vmem:[%s1 + $0x138] sm:$0xff]
      %v225 = vld [vmem:[%s1 + $0x140] sm:$0xff]
      %v226 = vld [vmem:[%s1 + $0x148] sm:$0xff]
      %v227 = vld [vmem:[%s1 + $0x150] sm:$0xff]
      %v228 = vld [vmem:[%s1 + $0x158] sm:$0xff]
      %v229 = vld [vmem:[%s1 + $0x160] sm:$0xff]
      %v230 = vld [vmem:[%s1 + $0x168] sm:$0xff]
      %v231 = vld [vmem:[%s1 + $0x170] sm:$0xff]
      %v232 = vld [vmem:[%s1 + $0x178] sm:$0xff]
      %v233 = vld [vmem:[%s1 + $0x180] sm:$0xff]
      %v234 = vld [vmem:[%s1 + $0x188] sm:$0xff]
      %v235 = vld [vmem:[%s1 + $0x190] sm:$0xff]
      %v236 = vld [vmem:[%s1 + $0x198] sm:$0xff]
      %v237 = vld [vmem:[%s1 + $0x1a0] sm:$0xff]
      %v238 = vld [vmem:[%s1 + $0x1a8] sm:$0xff]
      %v239 = vld [vmem:[%s1 + $0x1b0] sm:$0xff]
      %v240 = vld [vmem:[%s1 + $0x1b8] sm:$0xff]
      %v241 = vld [vmem:[%s1 + $0x1c0] sm:$0xff]
      %v242 = vld [vmem:[%s1 + $0x1c8] sm:$0xff]
      %v243 = vld [vmem:[%s1 + $0x1d0] sm:$0xff]
      %v244 = vld [vmem:[%s1 + $0x1d8] sm:$0xff]
      %v245 = vld [vmem:[%s1 + $0x1e0] sm:$0xff]
      %v246 = vld [vmem:[%s1 + $0x1e8] sm:$0xff]
      %v247 = vld [vmem:[%s1 + $0x1f0] sm:$0xff]
      %v248 = vld [vmem:[%s1 + $0x1f8] sm:$0xff]
      %v249 = vld [vmem:[%s2] sm:$0x1]
      %v251 = vlaneseq
      %v252 = vshrl.u32 %v251, 7
      %v253 = vsub.s32 0, %v252
      %v254 = vrot.slane %v249, %v253
      %256 = vmatprep.subr.mxu0 0.0
      %257 = vmatpush1.msra.mxu0 %v185
      %258 = vmatprep.subr.mxu0 0.0
      %259 = vmatpush1.msra.mxu0 %v186
      %260 = vmatprep.subr.mxu0 0.0
      %261 = vmatpush1.msra.mxu0 %v187
      %262 = vmatprep.subr.mxu0 0.0
      %263 = vmatpush1.msra.mxu0 %v188
      %264 = vmatprep.subr.mxu0 0.0
      %265 = vmatpush1.msra.mxu0 %v189
      %266 = vmatprep.subr.mxu0 0.0
      %267 = vmatpush1.msra.mxu0 %v190
      %268 = vmatprep.subr.mxu0 0.0
      %269 = vmatpush1.msra.mxu0 %v191
      %270 = vmatprep.subr.mxu0 0.0
      %271 = vmatpush1.msra.mxu0 %v192
      %272 = vmatprep.subr.mxu0 0.0
      %273 = vmatpush1.msra.mxu0 %v193
      %274 = vmatprep.subr.mxu0 0.0
      %275 = vmatpush1.msra.mxu0 %v194
      %276 = vmatprep.subr.mxu0 0.0
      %277 = vmatpush1.msra.mxu0 %v195
      %278 = vmatprep.subr.mxu0 0.0
      %279 = vmatpush1.msra.mxu0 %v196
      %280 = vmatprep.subr.mxu0 0.0
      %281 = vmatpush1.msra.mxu0 %v197
      %282 = vmatprep.subr.mxu0 0.0
      %283 = vmatpush1.msra.mxu0 %v198
      %284 = vmatprep.subr.mxu0 0.0
      %285 = vmatpush1.msra.mxu0 %v199
      %286 = vmatprep.subr.mxu0 0.0
      %287 = vmatpush1.msra.mxu0 %v200
      %288 = vmatprep.subr.mxu0 0.0
      %289 = vmatpush1.msra.mxu0 %v201
      %290 = vmatprep.subr.mxu0 0.0
      %291 = vmatpush1.msra.mxu0 %v202
      %292 = vmatprep.subr.mxu0 0.0
      %293 = vmatpush1.msra.mxu0 %v203
      %294 = vmatprep.subr.mxu0 0.0
      %295 = vmatpush1.msra.mxu0 %v204
      %296 = vmatprep.subr.mxu0 0.0
      %297 = vmatpush1.msra.mxu0 %v205
      %298 = vmatprep.subr.mxu0 0.0
      %299 = vmatpush1.msra.mxu0 %v206
      %300 = vmatprep.subr.mxu0 0.0
      %301 = vmatpush1.msra.mxu0 %v207
      %302 = vmatprep.subr.mxu0 0.0
      %303 = vmatpush1.msra.mxu0 %v208
      %304 = vmatprep.subr.mxu0 0.0
      %305 = vmatpush1.msra.mxu0 %v209
      %306 = vmatprep.subr.mxu0 0.0
      %307 = vmatpush1.msra.mxu0 %v210
      %308 = vmatprep.subr.mxu0 0.0
      %309 = vmatpush1.msra.mxu0 %v211
      %310 = vmatprep.subr.mxu0 0.0
      %311 = vmatpush1.msra.mxu0 %v212
      %312 = vmatprep.subr.mxu0 0.0
      %313 = vmatpush1.msra.mxu0 %v213
      %314 = vmatprep.subr.mxu0 0.0
      %315 = vmatpush1.msra.mxu0 %v214
      %316 = vmatprep.subr.mxu0 0.0
      %317 = vmatpush1.msra.mxu0 %v215
      %318 = vmatprep.subr.mxu0 0.0
      %319 = vmatpush1.msra.mxu0 %v216
      %320 = vmatprep.mubr.f32.mxu0 %v178
      %321 = vmatmul.mubr.f32.gmra.mrb[0].mxu0 %v177
      %v322 = vpop.f32.mrb[0].mxu0
      %v323 = vadd.f32 %v254, %v322
      %v324 = vpop.f32.mrb[0].mxu0
      %325 = vmatprep.mubr.f32.mxu0 %v182
      %326 = vmatmul.mubr.f32.gmra.mrb[0].mxu0 %v181
      %v327 = vpop.f32.mrb[0].mxu0
      %v328 = vadd.f32 %v254, %v327
      %v329 = vpop.f32.mrb[0].mxu0
      %330 = vdwg.mxu0
      %331 = vmatprep.subr.mxu0 0.0
      %332 = vmatpush1.msra.mxu0 %v217
      %333 = vmatprep.subr.mxu0 0.0
      %334 = vmatpush1.msra.mxu0 %v218
      %335 = vmatprep.subr.mxu0 0.0
      %336 = vmatpush1.msra.mxu0 %v219
      %337 = vmatprep.subr.mxu0 0.0
      %338 = vmatpush1.msra.mxu0 %v220
      %339 = vmatprep.subr.mxu0 0.0
      %340 = vmatpush1.msra.mxu0 %v221
      %341 = vmatprep.subr.mxu0 0.0
      %342 = vmatpush1.msra.mxu0 %v222
      %343 = vmatprep.subr.mxu0 0.0
      %344 = vmatpush1.msra.mxu0 %v223
      %345 = vmatprep.subr.mxu0 0.0
      %346 = vmatpush1.msra.mxu0 %v224
      %347 = vmatprep.subr.mxu0 0.0
      %348 = vmatpush1.msra.mxu0 %v225
      %349 = vmatprep.subr.mxu0 0.0
      %350 = vmatpush1.msra.mxu0 %v226
      %351 = vmatprep.subr.mxu0 0.0
      %352 = vmatpush1.msra.mxu0 %v227
      %353 = vmatprep.subr.mxu0 0.0
      %354 = vmatpush1.msra.mxu0 %v228
      %355 = vmatprep.subr.mxu0 0.0
      %356 = vmatpush1.msra.mxu0 %v229
      %357 = vmatprep.subr.mxu0 0.0
      %358 = vmatpush1.msra.mxu0 %v230
      %359 = vmatprep.subr.mxu0 0.0
      %360 = vmatpush1.msra.mxu0 %v231
      %361 = vmatprep.subr.mxu0 0.0
      %362 = vmatpush1.msra.mxu0 %v232
      %363 = vmatprep.subr.mxu0 0.0
      %364 = vmatpush1.msra.mxu0 %v233
      %365 = vmatprep.subr.mxu0 0.0
      %366 = vmatpush1.msra.mxu0 %v234
      %367 = vmatprep.subr.mxu0 0.0
      %368 = vmatpush1.msra.mxu0 %v235
      %369 = vmatprep.subr.mxu0 0.0
      %370 = vmatpush1.msra.mxu0 %v236
      %371 = vmatprep.subr.mxu0 0.0
      %372 = vmatpush1.msra.mxu0 %v237
      %373 = vmatprep.subr.mxu0 0.0
      %374 = vmatpush1.msra.mxu0 %v238
      %375 = vmatprep.subr.mxu0 0.0
      %376 = vmatpush1.msra.mxu0 %v239
      %377 = vmatprep.subr.mxu0 0.0
      %378 = vmatpush1.msra.mxu0 %v240
      %379 = vmatprep.subr.mxu0 0.0
      %380 = vmatpush1.msra.mxu0 %v241
      %381 = vmatprep.subr.mxu0 0.0
      %382 = vmatpush1.msra.mxu0 %v242
      %383 = vmatprep.subr.mxu0 0.0
      %384 = vmatpush1.msra.mxu0 %v243
      %385 = vmatprep.subr.mxu0 0.0
      %386 = vmatpush1.msra.mxu0 %v244
      %387 = vmatprep.subr.mxu0 0.0
      %388 = vmatpush1.msra.mxu0 %v245
      %389 = vmatprep.subr.mxu0 0.0
      %390 = vmatpush1.msra.mxu0 %v246
      %391 = vmatprep.subr.mxu0 0.0
      %392 = vmatpush1.msra.mxu0 %v247
      %393 = vmatprep.subr.mxu0 0.0
      %394 = vmatpush1.msra.mxu0 %v248
      %395 = vmatprep.mubr.f32.mxu0 %v180
      %396 = vmatmul.mubr.f32.gmra.mrb[0].mxu0 %v179
      %v397 = vpop.f32.mrb[0].mxu0
      %v398 = vadd.f32 %v323, %v397
      %v399 = vpop.f32.mrb[0].mxu0
      %400 = vmatprep.mubr.f32.mxu0 %v184
      %401 = vmatmul.mubr.f32.gmra.mrb[0].mxu0 %v183
      %v402 = vpop.f32.mrb[0].mxu0
      %v403 = vadd.f32 %v328, %v402
      %v404 = vpop.f32.mrb[0].mxu0
      %405 = vdwg.mxu0
      %v406 = vmul.f32 %v398, 1.442695
      %v407 = vpow.pop %v406
      %v408 = vmul.f32 %v403, 1.442695
      %v409 = vpow.pop %v408
      %v410 = vadd.f32 %v407, 1.0
      %v411 = vadd.f32 %v409, 1.0
      %v412 = vrcp.pop %v410
      %v413 = vmul.f32 1.0, %v412
      %v414 = vrcp.pop %v411
      %v415 = vmul.f32 1.0, %v414
      %vm416 = vcmask 15360
      %417 = vst.msk [vmem:[%s175] sm:$0xff] %vm416, %v413
      %418 = vst.msk [vmem:[%s175 + $0x8] sm:$0xff] %vm416, %v415
      %s419 = smul.u32 2, %s14
      %p420 = scmp.lt.s32.totalorder %s419, 7
      %s421 = scalar_select %p420, %s419, 7
      %s422 = smul.addr %s421, 8
      %s423 = scalar_lea.vmem %s3, %s422
      // Predicated region
      $region33: #{tpu_custom_call.1} parent=31 // pred_check
        %p424 = pneg %p100
      $region34: #{tpu_custom_call.1} parent=31 // pred_check_branch
        %426 = sbr.rel (%p424) target = $region36
      $region35: #{tpu_custom_call.1} parent=31 // pred_region
        %s427 = smul.u32 2, %s14
      $region36: #{tpu_custom_call.1} parent=31 // pred_fallthru
        _
    $region32: #{tpu_custom_call.1} parent=5 // pred_fallthru
      _
    %p428 = scmp.le.s32.totalorder 2, %s9
    // Predicated region
    $region37: #{tpu_custom_call.1} parent=5 // pred_check
      %p429 = pneg %p428
    $region38: #{tpu_custom_call.1} parent=5 // pred_check_branch
      %431 = sbr.rel (%p429) target = $region40
    $region39: #{tpu_custom_call.1} parent=5 // pred_region
      %s432 = ssub.s32 %s9, 2
      // Predicated region
      $region41: #{tpu_custom_call.1} parent=39 // pred_check
        %p433 = pneg %p106
      $region42: #{tpu_custom_call.1} parent=39 // pred_check_branch
        %435 = sbr.rel (%p433) target = $region44
      $region43: #{tpu_custom_call.1} parent=39 // pred_region
        %s436 = smul.u32 2, %s15
        %p437 = scmp.lt.s32.totalorder %s436, 7
        %s438 = scalar_select %p437, %s436, 7
        %s439 = smul.addr %s438, 8
        %s440 = scalar_lea.vmem %s3, %s439
      $region44: #{tpu_custom_call.1} parent=39 // pred_fallthru
        _
    $region40: #{tpu_custom_call.1} parent=5 // pred_fallthru
      _
  $region6: #{tpu_custom_call.1} parent=0 // loop_footer
    %s13 = sadd.s32 1, %s9
  $region7: #{tpu_custom_call.1} parent=0 // loop_footer_branch
    %8 = sbr.rel target = $region3
  $region8: #{tpu_custom_call.1} parent=0 // loop_exit
    _

</llo_original>
